<compile_context>
chip_gen: v7x
topology: tpu7x:2x2x1
jax: 0.10.0
libtpu: 0.0.40
codegen_flags: <defaults>
</compile_context>

<pallas_src>
import jax
import jax.numpy as jnp
from jax.experimental import pallas as pl
from jax.experimental.pallas import tpu as pltpu


def _round_up(x, m):
    return (x + m - 1) // m * m


def discriminator_kernel(emb_ref, pos_ref, w1a_ref, w1b_ref, b1_ref,
                         w2row_ref, b2_ref, out_ref):
    # lin1 on the (virtually) concatenated input: [emb | pos] @ [W1a; W1b] + b1
    h = jnp.dot(emb_ref[...], w1a_ref[...], preferred_element_type=jnp.float32)
    h = h + jnp.dot(pos_ref[...], w1b_ref[...], preferred_element_type=jnp.float32)
    h = jnp.maximum(h + b1_ref[...], 0.0)                     # ReLU (b1 is [1,H])

    # lin2 as VPU multiply + cross-lane reduce (MXU/VALU/XLU slots overlap;
    # avoids a 1-lane-wide MXU result).
    o = jnp.sum(h * w2row_ref[...], axis=-1, keepdims=True)   # (TN, 1)
    o = jnp.maximum(o + b2_ref[0, 0], 0.0)                    # ReLU, b2 scalar from SMEM

    # Relayout to a lane-dense (1, TN) row so the output store is an unmasked,
    # lane-dense vst instead of TN/8 single-lane masked stores.
    out_ref[...] = jnp.transpose(o).astype(out_ref.dtype)


def discriminator_forward(embeddings, positive, w1, b1, w2, b2, *, block_rows=4096):
    """embeddings, positive: [N, H]; w1: [2H, H]; b1: [H]; w2: [H, 1]; b2: [1]."""
    N, H = embeddings.shape
    assert positive.shape == (N, H)
    assert w1.shape == (2 * H, H)
    assert b1.shape == (H,)
    assert w2.shape == (H, 1)
    assert b2.shape == (1,)
    assert H % 8 == 0, "hidden_size must be a multiple of 8 for sublane tiling"

    # Row tile: as large as allowed (amortizes per-grid-step overhead), multiple of 8.
    TN = _round_up(min(block_rows, N), 8)
    # Keep at least 2 grid steps when possible so both v7x TensorCores get work
    # (v5e/v6e: grid is a serial loop, the split is harmless).
    if N > 8 and pl.cdiv(N, TN) < 2:
        TN = _round_up(pl.cdiv(N, 2), 8)
    num_tiles = pl.cdiv(N, TN)

    b1_2d = b1.reshape(1, H)
    w2_row = w2.reshape(1, H)        # column -> lane-dense row for VPU broadcast
    b2_2d = b2.reshape(1, 1)

    # VMEM budget (lane-padding aware: <128-lane blocks pad to 128 lanes).
    itemsize = jnp.dtype(embeddings.dtype).itemsize
    lanes_h = _round_up(H, 128)
    act_block = TN * lanes_h * itemsize                    # one (TN,H) input block
    w_block = _round_up(H, 8) * lanes_h * itemsize         # one (H,H) weight half
    vec_block = 8 * lanes_h * itemsize                     # b1 / w2_row
    out_block = 8 * _round_up(TN, 128) * itemsize          # one (1,TN) output row
    needed = (2 * 2 * act_block        # emb + pos, double-buffered
              + 2 * out_block          # output row, double-buffered
              + 2 * 2 * w_block        # W1a + W1b (resident, default double-buffer)
              + 2 * 2 * vec_block)     # b1 + w2_row
    try:
        vmem_cap = int(pltpu.get_tpu_info().vmem_capacity_bytes)
    except Exception:
        vmem_cap = 128 * 1024 * 1024
    cap = max(vmem_cap - 16 * 1024 * 1024, 32 * 1024 * 1024)   # headroom below physical VMEM
    vmem_limit = int(min(cap, max(32 * 1024 * 1024, 2 * needed)))

    out = pl.pallas_call(
        discriminator_kernel,
        out_shape=jax.ShapeDtypeStruct((num_tiles, 1, TN), embeddings.dtype),
        grid=(num_tiles,),
        in_specs=[
            pl.BlockSpec((TN, H), lambda i: (i, 0)),    # embeddings rows (pipelined; ragged last)
            pl.BlockSpec((TN, H), lambda i: (i, 0)),    # positive rows (pipelined; ragged last)
            pl.BlockSpec((H, H), lambda i: (0, 0)),     # W1[:H]  (multiplies emb), resident
            pl.BlockSpec((H, H), lambda i: (1, 0)),     # W1[H:]  (multiplies pos), resident
            pl.BlockSpec((1, H), lambda i: (0, 0)),     # b1, resident
            pl.BlockSpec((1, H), lambda i: (0, 0)),     # w2 row, resident
            pl.BlockSpec(memory_space=pltpu.MemorySpace.SMEM),  # b2 scalar
        ],
        out_specs=pl.BlockSpec((None, 1, TN), lambda i: (i, 0, 0)),  # lane-dense row per tile
        compiler_params=pltpu.CompilerParams(
            dimension_semantics=("parallel",),
            vmem_limit_bytes=vmem_limit,
        ),
    )(embeddings, positive, w1, w1, b1_2d, w2_row, b2_2d)

    # (num_tiles, 1, TN) -> (num_tiles*TN, 1); drop garbage tail rows of the ragged block.
    return out.reshape(num_tiles * TN, 1)[:N]


def reference_forward(embeddings, positive, w1, b1, w2, b2):
    cat = jnp.concatenate([embeddings, positive], axis=-1)
    pre = jnp.maximum(cat @ w1 + b1, 0.0)
    pre = jnp.maximum(pre @ w2 + b2, 0.0)
    return pre


def _make_params(key, H):
    k_w1, k_b1, k_w2, k_b2 = jax.random.split(key, 4)
    fan1 = 2 * H
    w1 = jax.random.uniform(k_w1, (2 * H, H), jnp.float32,
                            minval=-1.0 / jnp.sqrt(fan1), maxval=1.0 / jnp.sqrt(fan1))
    b1 = jax.random.uniform(k_b1, (H,), jnp.float32,
                            minval=-1.0 / jnp.sqrt(fan1), maxval=1.0 / jnp.sqrt(fan1))
    fan2 = H
    w2 = jax.random.uniform(k_w2, (H, 1), jnp.float32,
                            minval=-1.0 / jnp.sqrt(fan2), maxval=1.0 / jnp.sqrt(fan2))
    b2 = jax.random.uniform(k_b2, (1,), jnp.float32,
                            minval=-1.0 / jnp.sqrt(fan2), maxval=1.0 / jnp.sqrt(fan2))
    return w1, b1, w2, b2


if __name__ == "__main__":
    key = jax.random.PRNGKey(0)

    # --- small sanity check (single grid step), hidden_size=32 ---
    N, H = 8, 32
    k_emb, k_pos, k_par = jax.random.split(key, 3)
    embeddings = jax.random.normal(k_emb, (N, H), dtype=jnp.float32)
    positive = jax.random.normal(k_pos, (N, H), dtype=jnp.float32)
    w1, b1, w2, b2 = _make_params(k_par, H)

    out = discriminator_forward(embeddings, positive, w1, b1, w2, b2)
    out = jax.block_until_ready(out)
    ref = reference_forward(embeddings, positive, w1, b1, w2, b2)
    assert out.shape == (N, 1)
    assert jnp.allclose(out, ref, atol=1e-5, rtol=1e-5), "mismatch vs reference (small)"

    # --- multi-tile checks: ragged last block, 2-step split, 3-step grid ---
    N2, H2 = 300, 32
    k_emb2, k_pos2, k_par2 = jax.random.split(jax.random.PRNGKey(1), 3)
    embeddings2 = jax.random.normal(k_emb2, (N2, H2), dtype=jnp.float32)
    positive2 = jax.random.normal(k_pos2, (N2, H2), dtype=jnp.float32)
    w1b_, b1b_, w2b_, b2b_ = _make_params(k_par2, H2)
    ref2 = reference_forward(embeddings2, positive2, w1b_, b1b_, w2b_, b2b_)

    # default block_rows -> tile split in two (grid=2, ragged last block)
    out2 = discriminator_forward(embeddings2, positive2, w1b_, b1b_, w2b_, b2b_)
    out2 = jax.block_until_ready(out2)
    assert out2.shape == (N2, 1)
    assert jnp.allclose(out2, ref2, atol=1e-5, rtol=1e-5), "mismatch vs reference (2 tiles)"

    # explicit small tile -> grid of 3 row tiles + ragged last block
    out3 = discriminator_forward(embeddings2, positive2, w1b_, b1b_, w2b_, b2b_,
                                 block_rows=128)
    out3 = jax.block_until_ready(out3)
    assert out3.shape == (N2, 1)
    assert jnp.allclose(out3, ref2, atol=1e-5, rtol=1e-5), "mismatch vs reference (3 tiles)"

    print("KERNEL_OK")
</pallas_src>

<mosaic_0001>
module attributes {stable_mosaic.version = 11 : i64} {
  func.func @discriminator_kernel(%arg0: i32, %arg1: memref<8x32xf32, #tpu.memory_space<vmem>>, %arg2: memref<8x32xf32, #tpu.memory_space<vmem>>, %arg3: memref<32x32xf32, #tpu.memory_space<vmem>>, %arg4: memref<32x32xf32, #tpu.memory_space<vmem>>, %arg5: memref<1x32xf32, #tpu.memory_space<vmem>>, %arg6: memref<1x32xf32, #tpu.memory_space<vmem>>, %arg7: memref<1x1xf32, #tpu.memory_space<smem>>, %arg8: memref<1x1x8xf32, #tpu.memory_space<vmem>>) attributes {dimension_semantics = [#tpu.dimension_semantics<parallel>], iteration_bounds = array<i64: 1>, scalar_prefetch = 0 : i64, scratch_operands = 0 : i64, tpu.core_type = #tpu.core_type<tc>, window_params = [{transform_indices = @transform_0, window_bounds = array<i64: 8, 32>}, {transform_indices = @transform_1, window_bounds = array<i64: 8, 32>}, {transform_indices = @transform_2, window_bounds = array<i64: 32, 32>}, {transform_indices = @transform_3, window_bounds = array<i64: 32, 32>}, {pipeline_mode = #tpu.pipeline_mode<synchronous>, transform_indices = @transform_4, window_bounds = array<i64: 1, 32>}, {pipeline_mode = #tpu.pipeline_mode<synchronous>, transform_indices = @transform_5, window_bounds = array<i64: 1, 32>}, {transform_indices = @transform_6, window_bounds = array<i64: 1, 1>}, {transform_indices = @transform_7, window_bounds = array<i64: 1, 1, 8>}]} {
    %c0 = arith.constant 0 : index
    %c0_0 = arith.constant 0 : index
    %0 = vector.load %arg1[%c0, %c0_0] : memref<8x32xf32, #tpu.memory_space<vmem>>, vector<8x32xf32>
    %c0_1 = arith.constant 0 : index
    %c0_2 = arith.constant 0 : index
    %1 = vector.load %arg3[%c0_1, %c0_2] : memref<32x32xf32, #tpu.memory_space<vmem>>, vector<32x32xf32>
    %cst = arith.constant dense<0.000000e+00> : vector<8x32xf32>
    %2 = tpu.matmul %0, %1, %cst {dimension_numbers = #tpu.dot_dimension_numbers<[1], [0], [0], [1], [0, 0, 1, 1], [], []>} : vector<8x32xf32>, vector<32x32xf32>, vector<8x32xf32> -> vector<8x32xf32>
    %c0_3 = arith.constant 0 : index
    %c0_4 = arith.constant 0 : index
    %3 = vector.load %arg2[%c0_3, %c0_4] : memref<8x32xf32, #tpu.memory_space<vmem>>, vector<8x32xf32>
    %c0_5 = arith.constant 0 : index
    %c0_6 = arith.constant 0 : index
    %4 = vector.load %arg4[%c0_5, %c0_6] : memref<32x32xf32, #tpu.memory_space<vmem>>, vector<32x32xf32>
    %cst_7 = arith.constant dense<0.000000e+00> : vector<8x32xf32>
    %5 = tpu.matmul %3, %4, %cst_7 {dimension_numbers = #tpu.dot_dimension_numbers<[1], [0], [0], [1], [0, 0, 1, 1], [], []>} : vector<8x32xf32>, vector<32x32xf32>, vector<8x32xf32> -> vector<8x32xf32>
    %6 = arith.addf %2, %5 : vector<8x32xf32>
    %c0_8 = arith.constant 0 : index
    %c0_9 = arith.constant 0 : index
    %7 = vector.load %arg5[%c0_8, %c0_9] : memref<1x32xf32, #tpu.memory_space<vmem>>, vector<1x32xf32>
    %8 = vector.broadcast %7 : vector<1x32xf32> to vector<8x32xf32>
    %9 = arith.addf %6, %8 : vector<8x32xf32>
    %cst_10 = arith.constant 0.000000e+00 : f32
    %10 = vector.broadcast %cst_10 : f32 to vector<8x32xf32>
    %11 = arith.maximumf %9, %10 : vector<8x32xf32>
    %c0_11 = arith.constant 0 : index
    %c0_12 = arith.constant 0 : index
    %12 = vector.load %arg6[%c0_11, %c0_12] : memref<1x32xf32, #tpu.memory_space<vmem>>, vector<1x32xf32>
    %13 = vector.broadcast %12 : vector<1x32xf32> to vector<8x32xf32>
    %14 = arith.mulf %11, %13 : vector<8x32xf32>
    %cst_13 = arith.constant dense<0.000000e+00> : vector<8xf32>
    %15 = vector.multi_reduction <add>, %14, %cst_13 [1] : vector<8x32xf32> to vector<8xf32>
    %16 = vector.shape_cast %15 : vector<8xf32> to vector<8x1xf32>
    %c0_14 = arith.constant 0 : index
    %c0_15 = arith.constant 0 : index
    %17 = memref.load %arg7[%c0_14, %c0_15] : memref<1x1xf32, #tpu.memory_space<smem>>
    %18 = vector.broadcast %17 : f32 to vector<8x1xf32>
    %19 = arith.addf %16, %18 : vector<8x1xf32>
    %cst_16 = arith.constant 0.000000e+00 : f32
    %20 = vector.broadcast %cst_16 : f32 to vector<8x1xf32>
    %21 = arith.maximumf %19, %20 : vector<8x1xf32>
    %22 = tpu.transpose %21, [1, 0] : vector<8x1xf32> -> vector<1x8xf32>
    %c0_17 = arith.constant 0 : index
    %c0_18 = arith.constant 0 : index
    %c0_19 = arith.constant 0 : index
    %23 = vector.load %arg8[%c0_17, %c0_18, %c0_19] : memref<1x1x8xf32, #tpu.memory_space<vmem>>, vector<1x1x8xf32>
    %24 = vector.shape_cast %23 : vector<1x1x8xf32> to vector<1x8xf32>
    %25 = vector.shape_cast %22 : vector<1x8xf32> to vector<1x1x8xf32>
    tpu.vector_store %arg8[%c0_17, %c0_18, %c0_19], %25 {strides = array<i32>} : memref<1x1x8xf32, #tpu.memory_space<vmem>>, vector<1x1x8xf32>,
    return
  }
  func.func @transform_0(%arg0: i32) -> (i32, i32) {
    %c0_i32 = arith.constant 0 : i32
    %c0_i32_0 = arith.constant 0 : i32
    return %arg0, %c0_i32 : i32, i32
  }
  func.func @transform_1(%arg0: i32) -> (i32, i32) {
    %c0_i32 = arith.constant 0 : i32
    %c0_i32_0 = arith.constant 0 : i32
    return %arg0, %c0_i32 : i32, i32
  }
  func.func @transform_2(%arg0: i32) -> (i32, i32) {
    %c0_i32 = arith.constant 0 : i32
    %c0_i32_0 = arith.constant 0 : i32
    %c0_i32_1 = arith.constant 0 : i32
    return %c0_i32, %c0_i32_0 : i32, i32
  }
  func.func @transform_3(%arg0: i32) -> (i32, i32) {
    %c1_i32 = arith.constant 1 : i32
    %c0_i32 = arith.constant 0 : i32
    %c0_i32_0 = arith.constant 0 : i32
    return %c1_i32, %c0_i32 : i32, i32
  }
  func.func @transform_4(%arg0: i32) -> (i32, i32) {
    %c0_i32 = arith.constant 0 : i32
    %c0_i32_0 = arith.constant 0 : i32
    %c0_i32_1 = arith.constant 0 : i32
    return %c0_i32, %c0_i32_0 : i32, i32
  }
  func.func @transform_5(%arg0: i32) -> (i32, i32) {
    %c0_i32 = arith.constant 0 : i32
    %c0_i32_0 = arith.constant 0 : i32
    %c0_i32_1 = arith.constant 0 : i32
    return %c0_i32, %c0_i32_0 : i32, i32
  }
  func.func @transform_6(%arg0: i32) -> (i32, i32) {
    %c0_i32 = arith.constant 0 : i32
    %c0_i32_0 = arith.constant 0 : i32
    %c0_i32_1 = arith.constant 0 : i32
    return %c0_i32, %c0_i32_0 : i32, i32
  }
  func.func @transform_7(%arg0: i32) -> (i32, i32, i32) {
    %c0_i32 = arith.constant 0 : i32
    %c0_i32_0 = arith.constant 0 : i32
    %c0_i32_1 = arith.constant 0 : i32
    return %arg0, %c0_i32, %c0_i32_0 : i32, i32, i32
  }
}

</mosaic_0001>

<llo_original>
// kernel: tpu_custom_call.1
$region0: #{tpu_custom_call.1}
  #allocation0 [shape = 'u32[]', space=smem, size = 0x4, offset = 0x4, fixed_abs, tag = 'smem constant byte address 0x4 - core index']
  #allocation1 [shape = 'u32[144,128]{1,0:T(1,128)}', space=vmem, size = 0x12000, scoped, tag = 'internal scratch']
  #allocation2 [shape = 'f32[1,1]{1,0:T(1,128)S(6)}', space=smem, size = 0x200, scoped, tag = 'scoped memory for tpu_custom_call.1']
  %s0 = inlined_call_operand.vmem [shape: f32[8,32], index: 0, kind: input, shape index: {}]
  %s1 = inlined_call_operand.vmem [shape: f32[8,32], index: 1, kind: input, shape index: {}]
  %s2 = inlined_call_operand.vmem [shape: f32[64,32], index: 2, kind: input, shape index: {}]
  %s3 = inlined_call_operand.vmem [shape: f32[64,32], index: 3, kind: input, shape index: {}]
  %s4 = inlined_call_operand.vmem [shape: f32[1,32], index: 4, kind: input, shape index: {}]
  %s5 = inlined_call_operand.vmem [shape: f32[1,32], index: 5, kind: input, shape index: {}]
  %s6 = inlined_call_operand.<no memory space> [shape: f32[1,1], index: 6, kind: input, shape index: {}]
  %s7 = inlined_call_operand.hbm [shape: f32[1,1,8], index: 7, kind: output, shape index: {}]
  %s8 = sld [smem:[#allocation0]]
  $region38: #{tpu_custom_call.1} parent=0
    _
  %s10 = ssub.s32 1, %s8
  %s11 = scalar_select 0, %s10, %s8
  %12 = sst [smem:[#allocation2]] %s6
  $region1: #{tpu_custom_call.1} parent=0
    #allocation3 [shape = 'u8[512]{0}', space=vmem, size = 0x400, scoped, tag = 'output window, operand 0, single buffered']
    #allocation4 [shape = 's32[1]{0}', space=sflag, size = 0x4, scoped, tag = 'scoped memory for tpu_custom_call.1']
    %13 = vsyncpa [#allocation4], 0
    // Predicated region
    $region2: #{tpu_custom_call.1} parent=1 // pred_check
      _
    $region3: #{tpu_custom_call.1} parent=1 // pred_check_branch
      %15 = sbr.rel (0) target = $region5
    $region4: #{tpu_custom_call.1} parent=1 // pred_region
      _
    $region5: #{tpu_custom_call.1} parent=1 // pred_fallthru
      _
    // Predicated region
    $region6: #{tpu_custom_call.1} parent=1 // pred_check
      _
    $region7: #{tpu_custom_call.1} parent=1 // pred_check_branch
      %17 = sbr.rel (0) target = $region9
    $region8: #{tpu_custom_call.1} parent=1 // pred_region
      _
    $region9: #{tpu_custom_call.1} parent=1 // pred_fallthru
      _
    // Predicated region
    $region10: #{tpu_custom_call.1} parent=1 // pred_check
      _
    $region11: #{tpu_custom_call.1} parent=1 // pred_check_branch
      %19 = sbr.rel (0) target = $region13
    $region12: #{tpu_custom_call.1} parent=1 // pred_region
      _
    $region13: #{tpu_custom_call.1} parent=1 // pred_fallthru
      _
    // Predicated region
    $region14: #{tpu_custom_call.1} parent=1 // pred_check
      _
    $region15: #{tpu_custom_call.1} parent=1 // pred_check_branch
      %21 = sbr.rel (0) target = $region17
    $region16: #{tpu_custom_call.1} parent=1 // pred_region
      %s22 = scalar_lea.vmem %s3, 32
    $region17: #{tpu_custom_call.1} parent=1 // pred_fallthru
      _
    // Predicated region
    $region18: #{tpu_custom_call.1} parent=1 // pred_check
      _
    $region19: #{tpu_custom_call.1} parent=1 // pred_check_branch
      %24 = sbr.rel (0) target = $region21
    $region20: #{tpu_custom_call.1} parent=1 // pred_region
      _
    $region21: #{tpu_custom_call.1} parent=1 // pred_fallthru
      _
    // Predicated region
    $region22: #{tpu_custom_call.1} parent=1 // pred_check
      _
    $region23: #{tpu_custom_call.1} parent=1 // pred_check_branch
      %26 = sbr.rel (0) target = $region25
    $region24: #{tpu_custom_call.1} parent=1 // pred_region
      _
    $region25: #{tpu_custom_call.1} parent=1 // pred_fallthru
      _
    // Predicated region
    $region26: #{tpu_custom_call.1} parent=1 // pred_check
      _
    $region27: #{tpu_custom_call.1} parent=1 // pred_check_branch
      %28 = sbr.rel (0) target = $region29
    $region28: #{tpu_custom_call.1} parent=1 // pred_region
      _
    $region29: #{tpu_custom_call.1} parent=1 // pred_fallthru
      _
    %s29 = scalar_lea.vmem %s3, 32
    %s30 = scalar_lea.vmem %s3, 32
    %v31 = vld [vmem:[%s0] sm:$0xff]
    %v32 = vld [vmem:[%s2] sm:$0xff]
    %v33 = vld [vmem:[%s2 + $0x8] sm:$0xff]
    %v34 = vld [vmem:[%s2 + $0x10] sm:$0xff]
    %v35 = vld [vmem:[%s2 + $0x18] sm:$0xff]
    %v36 = vld [vmem:[%s1] sm:$0xff]
    %v37 = vld [vmem:[%s30] sm:$0xff]
    %v38 = vld [vmem:[%s30 + $0x8] sm:$0xff]
    %v39 = vld [vmem:[%s30 + $0x10] sm:$0xff]
    %v40 = vld [vmem:[%s30 + $0x18] sm:$0xff]
    %vm41 = vcmask 261120
    %v43 = vsel %vm41, %v36, 0
    %45 = vmatprep.subr.mxu0 0.0
    %46 = vmatpush1.msra.mxu0 %v37
    %47 = vmatprep.subr.mxu0 0.0
    %48 = vmatpush1.msra.mxu0 %v38
    %49 = vmatprep.subr.mxu0 0.0
    %50 = vmatpush1.msra.mxu0 %v39
    %51 = vmatprep.subr.mxu0 0.0
    %52 = vmatpush1.msra.mxu0 %v40
    %53 = vmatprep.subr.mxu0 0.0
    %54 = vmatpush1.msra.mxu0 0.0
    %55 = vmatprep.subr.mxu0 0.0
    %56 = vmatpush1.msra.mxu0 0.0
    %57 = vmatprep.subr.mxu0 0.0
    %58 = vmatpush1.msra.mxu0 0.0
    %59 = vmatprep.subr.mxu0 0.0
    %60 = vmatpush1.msra.mxu0 0.0
    %61 = vmatprep.subr.mxu0 0.0
    %62 = vmatpush1.msra.mxu0 0.0
    %63 = vmatprep.subr.mxu0 0.0
    %64 = vmatpush1.msra.mxu0 0.0
    %65 = vmatprep.subr.mxu0 0.0
    %66 = vmatpush1.msra.mxu0 0.0
    %67 = vmatprep.subr.mxu0 0.0
    %68 = vmatpush1.msra.mxu0 0.0
    %69 = vmatprep.subr.mxu0 0.0
    %70 = vmatpush1.msra.mxu0 0.0
    %71 = vmatprep.subr.mxu0 0.0
    %72 = vmatpush1.msra.mxu0 0.0
    %73 = vmatprep.subr.mxu0 0.0
    %74 = vmatpush1.msra.mxu0 0.0
    %75 = vmatprep.subr.mxu0 0.0
    %76 = vmatpush1.msra.mxu0 0.0
    %77 = vmatprep.subr.mxu0 0.0
    %78 = vmatpush1.msra.mxu0 0.0
    %79 = vmatprep.subr.mxu0 0.0
    %80 = vmatpush1.msra.mxu0 0.0
    %81 = vmatprep.subr.mxu0 0.0
    %82 = vmatpush1.msra.mxu0 0.0
    %83 = vmatprep.subr.mxu0 0.0
    %84 = vmatpush1.msra.mxu0 0.0
    %85 = vmatprep.subr.mxu0 0.0
    %86 = vmatpush1.msra.mxu0 0.0
    %87 = vmatprep.subr.mxu0 0.0
    %88 = vmatpush1.msra.mxu0 0.0
    %89 = vmatprep.subr.mxu0 0.0
    %90 = vmatpush1.msra.mxu0 0.0
    %91 = vmatprep.subr.mxu0 0.0
    %92 = vmatpush1.msra.mxu0 0.0
    %93 = vmatprep.subr.mxu0 0.0
    %94 = vmatpush1.msra.mxu0 0.0
    %95 = vmatprep.subr.mxu0 0.0
    %96 = vmatpush1.msra.mxu0 0.0
    %97 = vmatprep.subr.mxu0 0.0
    %98 = vmatpush1.msra.mxu0 0.0
    %99 = vmatprep.subr.mxu0 0.0
    %100 = vmatpush1.msra.mxu0 0.0
    %101 = vmatprep.subr.mxu0 0.0
    %102 = vmatpush1.msra.mxu0 0.0
    %103 = vmatprep.subr.mxu0 0.0
    %104 = vmatpush1.msra.mxu0 0.0
    %105 = vmatprep.subr.mxu0 0.0
    %106 = vmatpush1.msra.mxu0 0.0
    %107 = vmatprep.subr.mxu0 0.0
    %108 = vmatpush1.msra.mxu0 0.0
    %109 = vmatprep.mubr.f32.mxu0 0.0
    %110 = vmatmul.mubr.f32.gmra.mrb[0].mxu0 %v43
    %v111 = vpop.f32.mrb[0].mxu0
    %v112 = vadd.f32 0.0, %v111
    %v113 = vpop.f32.mrb[0].mxu0
    %114 = vdwg.mxu0
    %v116 = vsel %vm41, %v31, 0
    %118 = vmatprep.subr.mxu0 0.0
    %119 = vmatpush1.msra.mxu0 %v32
    %120 = vmatprep.subr.mxu0 0.0
    %121 = vmatpush1.msra.mxu0 %v33
    %122 = vmatprep.subr.mxu0 0.0
    %123 = vmatpush1.msra.mxu0 %v34
    %124 = vmatprep.subr.mxu0 0.0
    %125 = vmatpush1.msra.mxu0 %v35
    %126 = vmatprep.subr.mxu0 0.0
    %127 = vmatpush1.msra.mxu0 0.0
    %128 = vmatprep.subr.mxu0 0.0
    %129 = vmatpush1.msra.mxu0 0.0
    %130 = vmatprep.subr.mxu0 0.0
    %131 = vmatpush1.msra.mxu0 0.0
    %132 = vmatprep.subr.mxu0 0.0
    %133 = vmatpush1.msra.mxu0 0.0
    %134 = vmatprep.subr.mxu0 0.0
    %135 = vmatpush1.msra.mxu0 0.0
    %136 = vmatprep.subr.mxu0 0.0
    %137 = vmatpush1.msra.mxu0 0.0
    %138 = vmatprep.subr.mxu0 0.0
    %139 = vmatpush1.msra.mxu0 0.0
    %140 = vmatprep.subr.mxu0 0.0
    %141 = vmatpush1.msra.mxu0 0.0
    %142 = vmatprep.subr.mxu0 0.0
    %143 = vmatpush1.msra.mxu0 0.0
    %144 = vmatprep.subr.mxu0 0.0
    %145 = vmatpush1.msra.mxu0 0.0
    %146 = vmatprep.subr.mxu0 0.0
    %147 = vmatpush1.msra.mxu0 0.0
    %148 = vmatprep.subr.mxu0 0.0
    %149 = vmatpush1.msra.mxu0 0.0
    %150 = vmatprep.subr.mxu0 0.0
    %151 = vmatpush1.msra.mxu0 0.0
    %152 = vmatprep.subr.mxu0 0.0
    %153 = vmatpush1.msra.mxu0 0.0
    %154 = vmatprep.subr.mxu0 0.0
    %155 = vmatpush1.msra.mxu0 0.0
    %156 = vmatprep.subr.mxu0 0.0
    %157 = vmatpush1.msra.mxu0 0.0
    %158 = vmatprep.subr.mxu0 0.0
    %159 = vmatpush1.msra.mxu0 0.0
    %160 = vmatprep.subr.mxu0 0.0
    %161 = vmatpush1.msra.mxu0 0.0
    %162 = vmatprep.subr.mxu0 0.0
    %163 = vmatpush1.msra.mxu0 0.0
    %164 = vmatprep.subr.mxu0 0.0
    %165 = vmatpush1.msra.mxu0 0.0
    %166 = vmatprep.subr.mxu0 0.0
    %167 = vmatpush1.msra.mxu0 0.0
    %168 = vmatprep.subr.mxu0 0.0
    %169 = vmatpush1.msra.mxu0 0.0
    %170 = vmatprep.subr.mxu0 0.0
    %171 = vmatpush1.msra.mxu0 0.0
    %172 = vmatprep.subr.mxu0 0.0
    %173 = vmatpush1.msra.mxu0 0.0
    %174 = vmatprep.subr.mxu0 0.0
    %175 = vmatpush1.msra.mxu0 0.0
    %176 = vmatprep.subr.mxu0 0.0
    %177 = vmatpush1.msra.mxu0 0.0
    %178 = vmatprep.subr.mxu0 0.0
    %179 = vmatpush1.msra.mxu0 0.0
    %180 = vmatprep.subr.mxu0 0.0
    %181 = vmatpush1.msra.mxu0 0.0
    %182 = vmatprep.mubr.f32.mxu0 0.0
    %183 = vmatmul.mubr.f32.gmra.mrb[0].mxu0 %v116
    %v184 = vpop.f32.mrb[0].mxu0
    %v185 = vadd.f32 %v112, %v184
    %v186 = vpop.f32.mrb[0].mxu0
    %187 = vdwg.mxu0
    %v188 = vld [vmem:[%s4] sm:$0x1]
    %v190 = vlaneseq
    %v191 = vshrl.u32 %v190, 7
    %v192 = vsub.s32 0, %v191
    %v193 = vrot.slane %v188, %v192
    %v195 = vadd.f32 %v185, %v193
    %v196 = vmax.f32 %v195, 0.0
    %v197 = vld [vmem:[%s5] sm:$0x1]
    %v199 = vlaneseq
    %v200 = vshrl.u32 %v199, 7
    %v201 = vsub.s32 0, %v200
    %v202 = vrot.slane %v197, %v201
    %v204 = vmul.f32 %v196, %v202
    %v205 = vsel %vm41, %v204, 0.0
    %206 = vadd.xlane.f32.xlu0 %v205
    %v207 = vpop.xlane.xlu0 %206
    %s208 = sld [smem:[#allocation2]]
    %v209 = vstv %s208
    %v210 = vadd.f32 %v207, %v209
    %v211 = vmax.f32 %v210, 0.0
    %212 = vxpose.xlu0.b32.start [1/16] %v211, 128
    %213 = vxpose.xlu0.b32.cont [2/16] 0.0, 128
    %214 = vxpose.xlu0.b32.cont [3/16] 0.0, 128
    %215 = vxpose.xlu0.b32.cont [4/16] 0.0, 128
    %216 = vxpose.xlu0.b32.cont [5/16] 0.0, 128
    %217 = vxpose.xlu0.b32.cont [6/16] 0.0, 128
    %218 = vxpose.xlu0.b32.cont [7/16] 0.0, 128
    %219 = vxpose.xlu0.b32.cont [8/16] 0.0, 128
    %220 = vxpose.xlu0.b32.cont [9/16] 0.0, 128
    %221 = vxpose.xlu0.b32.cont [10/16] 0.0, 128
    %222 = vxpose.xlu0.b32.cont [11/16] 0.0, 128
    %223 = vxpose.xlu0.b32.cont [12/16] 0.0, 128
    %224 = vxpose.xlu0.b32.cont [13/16] 0.0, 128
    %225 = vxpose.xlu0.b32.cont [14/16] 0.0, 128
    %226 = vxpose.xlu0.b32.cont [15/16] 0.0, 128
    %227 = vxpose.xlu0.b32.end [16/16] 0.0, 128
    %v228 = vpop.trf.xlu0
    %v229 = vpop.trf.xlu0
    %v230 = vpop.trf.xlu0
    %v231 = vpop.trf.xlu0
    %v232 = vpop.trf.xlu0
    %v233 = vpop.trf.xlu0
    %v234 = vpop.trf.xlu0
    %v235 = vpop.trf.xlu0
    %v236 = vpop.trf.xlu0
    %v237 = vpop.trf.xlu0
    %v238 = vpop.trf.xlu0
    %v239 = vpop.trf.xlu0
    %v240 = vpop.trf.xlu0
    %v241 = vpop.trf.xlu0
    %v242 = vpop.trf.xlu0
    %v243 = vpop.trf.xlu0
    %vm244 = vcmask 57344
    %245 = vst.msk [vmem:[#allocation3] sm:$0x1] %vm244, %v228
    // Predicated region
    $region30: #{tpu_custom_call.1} parent=1 // pred_check
      _
    $region31: #{tpu_custom_call.1} parent=1 // pred_check_branch
      %247 = sbr.rel (0) target = $region33
    $region32: #{tpu_custom_call.1} parent=1 // pred_region
      %s249 = ssub.s32 16, 16
      %250 = vsyncadd [#allocation4], %s249
      %s252 = sshll.u32 [#allocation3], 4
      %s253 = int_to_ptr.vmem [resolvable:$true] %s252
      %255 = dma.vmem_to_hbm [thread:$0]  %s253, 16, %s7, [#allocation4]
    $region33: #{tpu_custom_call.1} parent=1 // pred_fallthru
      _
    // Predicated region
    $region34: #{tpu_custom_call.1} parent=1 // pred_check
      _
    $region35: #{tpu_custom_call.1} parent=1 // pred_check_branch
      %257 = sbr.rel (0) target = $region37
    $region36: #{tpu_custom_call.1} parent=1 // pred_region
      %258 = dma.done [#allocation4], 16
    $region37: #{tpu_custom_call.1} parent=1 // pred_fallthru
      _
    %259 = vsyncpa [#allocation4], 1

</llo_original>
